<compile_context>
chip_gen: v6e
topology: v6e:2x2x1
jax: 0.10.0
libtpu: 0.0.40
codegen_flags: <defaults>
</compile_context>

<pallas_src>
import jax
import jax.numpy as jnp
import numpy as np
from jax.experimental import pallas as pl
from jax.experimental.pallas import tpu as pltpu

H = W = 32                      # stand-in for FLAME's 512x512 texture
OUT_HW = H // 2                 # stand-in for 256 (after interpolate)
N_TEX = 8                       # number of texture basis components
N_FLAT_IN = H * W * 3           # raw flattened texture length (HWC)
N_OUT = 3 * OUT_HW * OUT_HW     # columns surviving the downsample (output size)
MAX_TILE_N = 32768              # per-review: bigger tiles; 6 even blocks at full scale
N_TEX_PAD_MULT = 16             # dense (16,128) sublane packing for the weight push


def _pick_tile_n(n_out, max_tile=MAX_TILE_N):
    """Largest multiple of 128 dividing n_out (<= max_tile), preferring a tile
    whose block count is even (or 1) so v7x's two TensorCores split the
    'parallel' grid axis evenly."""
    assert n_out % 128 == 0, "output column count must be a multiple of 128"
    cap = min(n_out, max_tile)
    best_any, best_even = None, None
    t = 128
    while t <= cap:
        if n_out % t == 0:
            nb = n_out // t
            best_any = t
            if nb == 1 or nb % 2 == 0:
                best_even = t
        t += 128
    return best_even if best_even is not None else best_any


def _output_column_order(h, w, out_hw):
    """Column indices into the HWC-flattened texture (length h*w*3) that, read
    in order and reshaped to [3, out_hw, out_hw], reproduce NCHW + nearest-2x
    downsample + BGR channel flip of the PyTorch forward.
    Note: folding assumes F.interpolate's default 'nearest' mode (as in the
    module); a bilinear/area mode would need a different fold."""
    # out[b, c, i, j] = flat[b, (2i)*w*3 + (2j)*3 + [2,1,0][c]]
    c = np.array([2, 1, 0], dtype=np.int64)[:, None, None]        # BGR flip
    i = (2 * np.arange(out_hw, dtype=np.int64))[None, :, None]    # nearest 2x rows
    j = (2 * np.arange(out_hw, dtype=np.int64))[None, None, :]    # nearest 2x cols
    cols = i * (w * 3) + j * 3 + c                                 # [3, out_hw, out_hw]
    return cols.reshape(-1)                                        # [3*out_hw*out_hw]


def prepare_flametex_params(texture_mean, texture_basis, h=H, w=W, out_hw=OUT_HW,
                            tile_n=None):
    """One-time constant prep (module-build time, not per call).

    texture_mean:  [1, h*w*3]       f32
    texture_basis: [h*w*3, n_tex]   f32  (== PC[:, :n_tex])

    Returns:
      basis_tiles: [n_blocks, n_tex_pad, tile_n] int8, tile-major (contig DMA)
      scales:      [1, n_tex_pad]                f32 per-component dequant scale
      mean_out:    [1, n_out]                    f32
      tile_n:      int
    """
    cols = _output_column_order(h, w, out_hw)
    n_out = cols.shape[0]
    if tile_n is None:
        tile_n = _pick_tile_n(n_out)
    assert n_out % tile_n == 0
    n_blocks = n_out // tile_n

    basis_np = np.asarray(texture_basis, dtype=np.float32)
    mean_np = np.asarray(texture_mean, dtype=np.float32)
    n_tex = basis_np.shape[-1]
    n_tex_pad = -(-n_tex // N_TEX_PAD_MULT) * N_TEX_PAD_MULT

    basis_t = basis_np.T[:, cols]                                    # [n_tex, n_out]
    basis_pad = np.zeros((n_tex_pad, n_out), dtype=np.float32)
    basis_pad[:n_tex] = basis_t

    # Symmetric per-component int8 quantization (padded rows stay exactly 0).
    row_max = np.max(np.abs(basis_pad), axis=1, keepdims=True)       # [n_tex_pad, 1]
    scale = row_max / 127.0
    safe = np.where(scale > 0.0, scale, 1.0)
    basis_q = np.clip(np.rint(basis_pad / safe), -127, 127).astype(np.int8)

    basis_tiles = jnp.asarray(
        basis_q.reshape(n_tex_pad, n_blocks, tile_n).transpose(1, 0, 2)
    )                                                                # [nb, n_tex_pad, tile_n] int8
    scales = jnp.asarray(scale.reshape(1, n_tex_pad).astype(np.float32))
    mean_out = jnp.asarray(mean_np[:, cols])                         # [1, n_out] f32
    return basis_tiles, scales, mean_out, tile_n


def flametex_kernel(texcode_ref, scale_ref, basis_ref, mean_ref, out_ref):
    # texcode_ref: [bz, n_tex_pad]          f32 (resident across all grid steps)
    # scale_ref:   [1, n_tex_pad]           f32 per-component dequant scale
    # basis_ref:   [1, n_tex_pad, tile_n]   int8 tile-major basis block (the HBM stream)
    # mean_ref:    [1, tile_n]              f32
    # out_ref:     [bz, tile_n]             f32 (lane-dense output tile)
    code = (texcode_ref[...] * scale_ref[...]).astype(jnp.bfloat16)   # fold dequant into code
    basis = basis_ref[0].astype(jnp.bfloat16)                         # exact int8->bf16 (VPU)
    acc = jnp.dot(code, basis, preferred_element_type=jnp.float32)
    out_ref[...] = acc + mean_ref[...]


def flametex_forward(texcode, basis_tiles, scales, mean_out, out_hw=OUT_HW):
    """texcode: [bz, n_tex] -> texture: [bz, 3, out_hw, out_hw] (BGR order)."""
    bz, n_tex = texcode.shape
    n_blocks, n_tex_pad, tile_n = basis_tiles.shape
    n_out = n_blocks * tile_n

    # texcode stays f32; pad its components with zeros to match the padded basis.
    texcode = texcode.astype(jnp.float32)
    if n_tex_pad != n_tex:
        texcode = jnp.pad(texcode, ((0, 0), (0, n_tex_pad - n_tex)))

    cost = pl.CostEstimate(
        flops=2 * bz * n_tex_pad * n_out,
        transcendentals=0,
        bytes_accessed=(basis_tiles.size * 1          # int8 basis stream (dominant)
                        + mean_out.size * 4
                        + texcode.size * 4 + scales.size * 4
                        + bz * n_out * 4),             # f32 output
    )

    out_flat = pl.pallas_call(
        flametex_kernel,
        out_shape=jax.ShapeDtypeStruct((bz, n_out), jnp.float32),
        grid_spec=pltpu.PrefetchScalarGridSpec(
            num_scalar_prefetch=0,
            grid=(n_blocks,),
            in_specs=[
                pl.BlockSpec((bz, n_tex_pad), lambda j: (0, 0)),            # texcode (whole)
                pl.BlockSpec((1, n_tex_pad), lambda j: (0, 0)),             # scales (whole)
                pl.BlockSpec((1, n_tex_pad, tile_n), lambda j: (j, 0, 0)),  # basis tile (contig)
                pl.BlockSpec((1, tile_n), lambda j: (0, j)),                # mean tile
            ],
            out_specs=pl.BlockSpec((bz, tile_n), lambda j: (0, j)),
        ),
        compiler_params=pltpu.CompilerParams(
            dimension_semantics=("parallel",),        # balanced across v7x's 2 TCs
            vmem_limit_bytes=48 * 1024 * 1024,        # headroom for full-scale tiles
        ),
        cost_estimate=cost,
    )(texcode, scales, basis_tiles, mean_out)

    # Column order already encodes NCHW + nearest 2x downsample + BGR flip:
    return out_flat.reshape(bz, 3, out_hw, out_hw)


if __name__ == "__main__":
    key = jax.random.PRNGKey(0)
    k_mean, k_basis, k_code = jax.random.split(key, 3)

    # Deterministic synthetic "model buffers" (the real module loads an .npz):
    texture_mean = jax.random.uniform(k_mean, (1, N_FLAT_IN), dtype=jnp.float32)
    texture_basis = 0.01 * jax.random.normal(
        k_basis, (N_FLAT_IN, N_TEX), dtype=jnp.float32
    )

    # One-time parameter prep: pre-slice to surviving pixels, fold BGR/NCHW
    # column order, pad n_tex to 16, int8-quantize the tile-major basis.
    basis_tiles, scales, mean_out, tile_n = prepare_flametex_params(
        texture_mean, texture_basis
    )

    batch = 2
    texcode = jax.random.normal(k_code, (batch, N_TEX), dtype=jnp.float32)

    tex = jax.block_until_ready(
        flametex_forward(texcode, basis_tiles, scales, mean_out)
    )
    assert tex.shape == (batch, 3, OUT_HW, OUT_HW), tex.shape

    # Pure-JAX f32 reference of the original PyTorch forward (un-preprocessed
    # constants): validates the folded column reordering and the int8/bf16
    # numerics (basis deltas are small; mean stays f32, so abs error is tiny).
    ref_flat = texture_mean + texcode @ texture_basis.T                # [bz, N_FLAT_IN]
    ref = ref_flat.reshape(batch, H, W, 3).transpose(0, 3, 1, 2)       # NCHW
    ref = ref[:, :, ::2, ::2][:, ::-1, :, :]                           # nearest 2x + BGR
    assert jnp.allclose(tex, ref, atol=1e-2), "mismatch vs reference"

    print("KERNEL_OK")
</pallas_src>

<mosaic_0001>
module attributes {stable_mosaic.version = 11 : i64} {
  func.func @flametex_kernel(%arg0: i32, %arg1: memref<2x16xf32, #tpu.memory_space<vmem>>, %arg2: memref<1x16xf32, #tpu.memory_space<vmem>>, %arg3: memref<1x16x768xi8, #tpu.memory_space<vmem>>, %arg4: memref<1x768xf32, #tpu.memory_space<vmem>>, %arg5: memref<2x768xf32, #tpu.memory_space<vmem>>) attributes {dimension_semantics = [#tpu.dimension_semantics<parallel>], iteration_bounds = array<i64: 1>, scalar_prefetch = 0 : i64, scratch_operands = 0 : i64, tpu.core_type = #tpu.core_type<tc>, window_params = [{pipeline_mode = #tpu.pipeline_mode<synchronous>, transform_indices = @transform_0, window_bounds = array<i64: 2, 16>}, {pipeline_mode = #tpu.pipeline_mode<synchronous>, transform_indices = @transform_1, window_bounds = array<i64: 1, 16>}, {transform_indices = @transform_2, window_bounds = array<i64: 1, 16, 768>}, {transform_indices = @transform_3, window_bounds = array<i64: 1, 768>}, {transform_indices = @transform_4, window_bounds = array<i64: 2, 768>}]} {
    %c0 = arith.constant 0 : index
    %c0_0 = arith.constant 0 : index
    %0 = vector.load %arg1[%c0, %c0_0] : memref<2x16xf32, #tpu.memory_space<vmem>>, vector<2x16xf32>
    %c0_1 = arith.constant 0 : index
    %c0_2 = arith.constant 0 : index
    %1 = vector.load %arg2[%c0_1, %c0_2] : memref<1x16xf32, #tpu.memory_space<vmem>>, vector<1x16xf32>
    %2 = vector.broadcast %1 : vector<1x16xf32> to vector<2x16xf32>
    %3 = arith.mulf %0, %2 : vector<2x16xf32>
    %4 = arith.truncf %3 : vector<2x16xf32> to vector<2x16xbf16>
    %c0_3 = arith.constant 0 : index
    %c0_4 = arith.constant 0 : index
    %c0_5 = arith.constant 0 : index
    %5 = vector.load %arg3[%c0_3, %c0_4, %c0_5] : memref<1x16x768xi8, #tpu.memory_space<vmem>>, vector<1x16x768xi8>
    %6 = vector.shape_cast %5 : vector<1x16x768xi8> to vector<16x768xi8>
    %7 = arith.sitofp %6 : vector<16x768xi8> to vector<16x768xbf16>
    %cst = arith.constant dense<0.000000e+00> : vector<2x768xf32>
    %8 = tpu.matmul %4, %7, %cst {dimension_numbers = #tpu.dot_dimension_numbers<[1], [0], [0], [1], [0, 0, 1, 1], [], []>} : vector<2x16xbf16>, vector<16x768xbf16>, vector<2x768xf32> -> vector<2x768xf32>
    %c0_6 = arith.constant 0 : index
    %c0_7 = arith.constant 0 : index
    %9 = vector.load %arg4[%c0_6, %c0_7] : memref<1x768xf32, #tpu.memory_space<vmem>>, vector<1x768xf32>
    %10 = vector.broadcast %9 : vector<1x768xf32> to vector<2x768xf32>
    %11 = arith.addf %8, %10 : vector<2x768xf32>
    %c0_8 = arith.constant 0 : index
    %c0_9 = arith.constant 0 : index
    %12 = vector.load %arg5[%c0_8, %c0_9] : memref<2x768xf32, #tpu.memory_space<vmem>>, vector<2x768xf32>
    tpu.vector_store %arg5[%c0_8, %c0_9], %11 {strides = array<i32>} : memref<2x768xf32, #tpu.memory_space<vmem>>, vector<2x768xf32>,
    return
  }
  func.func @transform_0(%arg0: i32) -> (i32, i32) {
    %c0_i32 = arith.constant 0 : i32
    %c0_i32_0 = arith.constant 0 : i32
    %c0_i32_1 = arith.constant 0 : i32
    return %c0_i32, %c0_i32_0 : i32, i32
  }
  func.func @transform_1(%arg0: i32) -> (i32, i32) {
    %c0_i32 = arith.constant 0 : i32
    %c0_i32_0 = arith.constant 0 : i32
    %c0_i32_1 = arith.constant 0 : i32
    return %c0_i32, %c0_i32_0 : i32, i32
  }
  func.func @transform_2(%arg0: i32) -> (i32, i32, i32) {
    %c0_i32 = arith.constant 0 : i32
    %c0_i32_0 = arith.constant 0 : i32
    %c0_i32_1 = arith.constant 0 : i32
    return %arg0, %c0_i32, %c0_i32_0 : i32, i32, i32
  }
  func.func @transform_3(%arg0: i32) -> (i32, i32) {
    %c0_i32 = arith.constant 0 : i32
    %c0_i32_0 = arith.constant 0 : i32
    return %c0_i32, %arg0 : i32, i32
  }
  func.func @transform_4(%arg0: i32) -> (i32, i32) {
    %c0_i32 = arith.constant 0 : i32
    %c0_i32_0 = arith.constant 0 : i32
    return %c0_i32, %arg0 : i32, i32
  }
}

</mosaic_0001>

<llo_original>
// kernel: tpu_custom_call.1
$region0: #{tpu_custom_call.1}
  #allocation0 [shape = 'u32[]', space=smem, size = 0x4, offset = 0x4, fixed_abs, tag = 'smem constant byte address 0x4 - core index']
  #allocation1 [shape = 'u32[144,128]{1,0:T(1,128)}', space=vmem, size = 0x12000, scoped, tag = 'internal scratch']
  %s0 = inlined_call_operand.hbm [shape: f32[2,16], index: 0, kind: input, shape index: {}]
  %s1 = inlined_call_operand.vmem [shape: f32[1,16], index: 1, kind: input, shape index: {}]
  %s2 = inlined_call_operand.hbm [shape: s8[1,16,768], index: 2, kind: input, shape index: {}]
  %s3 = inlined_call_operand.hbm [shape: f32[1,768], index: 3, kind: input, shape index: {}]
  %s4 = inlined_call_operand.hbm [shape: f32[2,768], index: 4, kind: output, shape index: {}]
  %s5 = sld [smem:[#allocation0]]
  $region38: #{tpu_custom_call.1} parent=0
    _
  %s7 = ssub.s32 1, %s5
  %s8 = scalar_select 0, %s7, %s5
  $region1: #{tpu_custom_call.1} parent=0
    #allocation2 [shape = 'u8[1024]{0}', space=vmem, size = 0x400, scoped, tag = 'input window, operand 0, single buffered']
    #allocation3 [shape = 's32[1]{0}', space=sflag, size = 0x4, scoped, tag = 'scoped memory for tpu_custom_call.1']
    #allocation4 [shape = 's32[1]{0}', space=sflag, size = 0x4, scoped, tag = 'scoped memory for tpu_custom_call.1']
    #allocation5 [shape = 'u8[12288]{0}', space=vmem, size = 0x3000, scoped, tag = 'input window, operand 2, single buffered']
    #allocation6 [shape = 's32[1]{0}', space=sflag, size = 0x4, scoped, tag = 'scoped memory for tpu_custom_call.1']
    #allocation7 [shape = 'u8[3072]{0}', space=vmem, size = 0xc00, scoped, tag = 'input window, operand 3, single buffered']
    #allocation8 [shape = 'u8[6144]{0}', space=vmem, size = 0x1800, scoped, tag = 'output window, operand 0, single buffered']
    %9 = vsyncpa [#allocation3], 0
    %10 = vsyncpa [#allocation6], 0
    %11 = vsyncpa [#allocation4], 0
    // Predicated region
    $region2: #{tpu_custom_call.1} parent=1 // pred_check
      _
    $region3: #{tpu_custom_call.1} parent=1 // pred_check_branch
      %13 = sbr.rel (0) target = $region5
    $region4: #{tpu_custom_call.1} parent=1 // pred_region
      %s15 = ssub.s32 32, 32
      %16 = vsyncadd [#allocation3], %s15
      %s18 = sshll.u32 [#allocation2], 4
      %s19 = int_to_ptr.vmem [resolvable:$true] %s18
      %21 = dma.hbm_to_vmem [thread:$0]  %s0, 32, %s19, [#allocation3]
    $region5: #{tpu_custom_call.1} parent=1 // pred_fallthru
      _
    // Predicated region
    $region6: #{tpu_custom_call.1} parent=1 // pred_check
      _
    $region7: #{tpu_custom_call.1} parent=1 // pred_check_branch
      %23 = sbr.rel (0) target = $region9
    $region8: #{tpu_custom_call.1} parent=1 // pred_region
      _
    $region9: #{tpu_custom_call.1} parent=1 // pred_fallthru
      _
    // Predicated region
    $region10: #{tpu_custom_call.1} parent=1 // pred_check
      _
    $region11: #{tpu_custom_call.1} parent=1 // pred_check_branch
      %25 = sbr.rel (0) target = $region13
    $region12: #{tpu_custom_call.1} parent=1 // pred_region
      %s27 = ssub.s32 384, 384
      %28 = vsyncadd [#allocation6], %s27
      %s29 = sshll.u32 [#allocation5], 4
      %s30 = int_to_ptr.vmem [resolvable:$true] %s29
      %35 = dma.hbm_to_vmem [thread:$0]  %s2, 384, %s30, [#allocation6], 192, 192, 12
    $region13: #{tpu_custom_call.1} parent=1 // pred_fallthru
      _
    // Predicated region
    $region14: #{tpu_custom_call.1} parent=1 // pred_check
      _
    $region15: #{tpu_custom_call.1} parent=1 // pred_check_branch
      %37 = sbr.rel (0) target = $region17
    $region16: #{tpu_custom_call.1} parent=1 // pred_region
      %s39 = ssub.s32 96, 96
      %40 = vsyncadd [#allocation6], %s39
      %s42 = sshll.u32 [#allocation7], 4
      %s43 = int_to_ptr.vmem [resolvable:$true] %s42
      %45 = dma.hbm_to_vmem [thread:$0]  %s3, 96, %s43, [#allocation6]
    $region17: #{tpu_custom_call.1} parent=1 // pred_fallthru
      _
    // Predicated region
    $region18: #{tpu_custom_call.1} parent=1 // pred_check
      _
    $region19: #{tpu_custom_call.1} parent=1 // pred_check_branch
      %47 = sbr.rel (0) target = $region21
    $region20: #{tpu_custom_call.1} parent=1 // pred_region
      %48 = dma.done [#allocation3], 32
    $region21: #{tpu_custom_call.1} parent=1 // pred_fallthru
      _
    // Predicated region
    $region22: #{tpu_custom_call.1} parent=1 // pred_check
      _
    $region23: #{tpu_custom_call.1} parent=1 // pred_check_branch
      %50 = sbr.rel (0) target = $region25
    $region24: #{tpu_custom_call.1} parent=1 // pred_region
      %51 = dma.done [#allocation6], 384
    $region25: #{tpu_custom_call.1} parent=1 // pred_fallthru
      _
    // Predicated region
    $region26: #{tpu_custom_call.1} parent=1 // pred_check
      _
    $region27: #{tpu_custom_call.1} parent=1 // pred_check_branch
      %53 = sbr.rel (0) target = $region29
    $region28: #{tpu_custom_call.1} parent=1 // pred_region
      %54 = dma.done [#allocation6], 96
    $region29: #{tpu_custom_call.1} parent=1 // pred_fallthru
      _
    %v56 = vld [vmem:[#allocation2] sm:$0x3]
    %v57 = vld [vmem:[%s1] sm:$0x1]
    %v59 = vlaneseq
    %v60 = vshrl.u32 %v59, 7
    %v61 = vsub.s32 0, %v60
    %v62 = vrot.slane %v57, %v61
    %v64 = vmul.f32 %v56, %v62
    %v65 = vpack.c.bf16 %v64, %v64
    %v66 = vld [vmem:[#allocation5] sm:$0xff]
    %v67 = vld [vmem:[#allocation5 + $0x8] sm:$0xf]
    %v68 = vld [vmem:[#allocation5 + $0xc] sm:$0xff]
    %v69 = vld [vmem:[#allocation5 + $0x14] sm:$0xf]
    %v70 = vunpack.c.l.s8.bf16 %v66
    %v71 = vunpack.c.h.s8.bf16 %v66
    %v72 = vunpack.c.l.s8.bf16 %v67
    %v73 = vunpack.c.l.s8.bf16 %v68
    %v74 = vunpack.c.h.s8.bf16 %v68
    %v75 = vunpack.c.l.s8.bf16 %v69
    %v76 = vld [vmem:[#allocation7] sm:$0x3f]
    %v78 = vlaneseq
    %v79 = vshrl.u32 %v78, 7
    %v80 = vsub.s32 0, %v79
    %v81 = vrot.slane %v76, %v80
    %v82 = vlaneseq
    %v83 = vshrl.u32 %v82, 7
    %v84 = vsub.s32 1, %v83
    %v85 = vrot.slane %v76, %v84
    %v86 = vlaneseq
    %v87 = vshrl.u32 %v86, 7
    %v88 = vsub.s32 2, %v87
    %v89 = vrot.slane %v76, %v88
    %v90 = vlaneseq
    %v91 = vshrl.u32 %v90, 7
    %v92 = vsub.s32 3, %v91
    %v93 = vrot.slane %v76, %v92
    %v94 = vlaneseq
    %v95 = vshrl.u32 %v94, 7
    %v96 = vsub.s32 4, %v95
    %v97 = vrot.slane %v76, %v96
    %v98 = vlaneseq
    %v99 = vshrl.u32 %v98, 7
    %v100 = vsub.s32 5, %v99
    %v101 = vrot.slane %v76, %v100
    %v114 = vunpack.c.l.b16 %v70
    %v115 = vunpack.c.h.b16 %v70
    %v116 = vunpack.c.l.b16 %v71
    %v117 = vunpack.c.h.b16 %v71
    %v118 = vunpack.c.l.b16 %v72
    %v119 = vunpack.c.h.b16 %v72
    %v120 = vunpack.c.l.b16 %v73
    %v121 = vunpack.c.h.b16 %v73
    %v122 = vunpack.c.l.b16 %v74
    %v123 = vunpack.c.h.b16 %v74
    %v124 = vunpack.c.l.b16 %v75
    %v125 = vunpack.c.h.b16 %v75
    %v126 = vpack.c.b16 %v120, %v114
    %v127 = vpack.c.b16 %v121, %v115
    %v128 = vpack.c.b16 %v122, %v116
    %v129 = vpack.c.b16 %v123, %v117
    %v130 = vpack.c.b16 %v124, %v118
    %v131 = vpack.c.b16 %v125, %v119
    %vm138 = vcmask 130048
    %v140 = vsel %vm138, %v65, 0
    %142 = vmatprep.subr.bf16.mxu0 0
    %143 = vmatpush1.bf16.msra.mxu0 0
    %144 = vmatprep.subr.bf16.mxu0 0
    %145 = vmatpush1.bf16.msra.mxu0 0
    %146 = vmatprep.subr.bf16.mxu0 0
    %147 = vmatpush1.bf16.msra.mxu0 0
    %148 = vmatprep.subr.bf16.mxu0 0
    %149 = vmatpush1.bf16.msra.mxu0 0
    %150 = vmatprep.subr.bf16.mxu0 0
    %151 = vmatpush1.bf16.msra.mxu0 0
    %152 = vmatprep.subr.bf16.mxu0 0
    %153 = vmatpush1.bf16.msra.mxu0 0
    %154 = vmatprep.subr.bf16.mxu0 0
    %155 = vmatpush1.bf16.msra.mxu0 0
    %156 = vmatprep.subr.bf16.mxu0 %v127
    %157 = vmatpush1.bf16.msra.mxu0 %v126
    %158 = vmatprep.subr.bf16.mxu0 0
    %159 = vmatpush2.bf16.msra.mxu0 0
    %160 = vmatprep.subr.bf16.mxu0 0
    %161 = vmatpush2.bf16.msra.mxu0 0
    %162 = vmatprep.subr.bf16.mxu0 0
    %163 = vmatpush2.bf16.msra.mxu0 0
    %164 = vmatprep.subr.bf16.mxu0 0
    %165 = vmatpush2.bf16.msra.mxu0 0
    %166 = vmatprep.subr.bf16.mxu0 0
    %167 = vmatpush2.bf16.msra.mxu0 0
    %168 = vmatprep.subr.bf16.mxu0 0
    %169 = vmatpush2.bf16.msra.mxu0 0
    %170 = vmatprep.subr.bf16.mxu0 0
    %171 = vmatpush2.bf16.msra.mxu0 0
    %172 = vmatprep.subr.bf16.mxu0 0
    %173 = vmatpush2.bf16.msra.mxu0 0
    %174 = vmatprep.mubr.bf16.mxu0 0
    %175 = vmatmul.mubr.bf16.gmra.mxu0 %v140
    %v176 = vpop.f32.mrf.mxu0
    %v177 = vadd.f32 %v81, %v176
    %v178 = vpop.f32.mrf.mxu0
    %v179 = vadd.f32 %v85, %v178
    %v180 = vpop.f32.mrf.mxu0
    %v181 = vpop.f32.mrf.mxu0
    %182 = vdwg.mxu0
    %183 = vmatprep.subr.bf16.mxu0 0
    %184 = vmatpush1.bf16.msra.mxu0 0
    %185 = vmatprep.subr.bf16.mxu0 0
    %186 = vmatpush1.bf16.msra.mxu0 0
    %187 = vmatprep.subr.bf16.mxu0 0
    %188 = vmatpush1.bf16.msra.mxu0 0
    %189 = vmatprep.subr.bf16.mxu0 0
    %190 = vmatpush1.bf16.msra.mxu0 0
    %191 = vmatprep.subr.bf16.mxu0 0
    %192 = vmatpush1.bf16.msra.mxu0 0
    %193 = vmatprep.subr.bf16.mxu0 0
    %194 = vmatpush1.bf16.msra.mxu0 0
    %195 = vmatprep.subr.bf16.mxu0 0
    %196 = vmatpush1.bf16.msra.mxu0 0
    %197 = vmatprep.subr.bf16.mxu0 %v129
    %198 = vmatpush1.bf16.msra.mxu0 %v128
    %199 = vmatprep.subr.bf16.mxu0 0
    %200 = vmatpush2.bf16.msra.mxu0 0
    %201 = vmatprep.subr.bf16.mxu0 0
    %202 = vmatpush2.bf16.msra.mxu0 0
    %203 = vmatprep.subr.bf16.mxu0 0
    %204 = vmatpush2.bf16.msra.mxu0 0
    %205 = vmatprep.subr.bf16.mxu0 0
    %206 = vmatpush2.bf16.msra.mxu0 0
    %207 = vmatprep.subr.bf16.mxu0 0
    %208 = vmatpush2.bf16.msra.mxu0 0
    %209 = vmatprep.subr.bf16.mxu0 0
    %210 = vmatpush2.bf16.msra.mxu0 0
    %211 = vmatprep.subr.bf16.mxu0 0
    %212 = vmatpush2.bf16.msra.mxu0 0
    %213 = vmatprep.subr.bf16.mxu0 0
    %214 = vmatpush2.bf16.msra.mxu0 0
    %215 = vmatprep.mubr.bf16.mxu0 0
    %216 = vmatmul.mubr.bf16.gmra.mxu0 %v140
    %v217 = vpop.f32.mrf.mxu0
    %v218 = vadd.f32 %v89, %v217
    %v219 = vpop.f32.mrf.mxu0
    %v220 = vadd.f32 %v93, %v219
    %v221 = vpop.f32.mrf.mxu0
    %v222 = vpop.f32.mrf.mxu0
    %223 = vdwg.mxu0
    %224 = vmatprep.subr.bf16.mxu0 0
    %225 = vmatpush1.bf16.msra.mxu0 0
    %226 = vmatprep.subr.bf16.mxu0 0
    %227 = vmatpush1.bf16.msra.mxu0 0
    %228 = vmatprep.subr.bf16.mxu0 0
    %229 = vmatpush1.bf16.msra.mxu0 0
    %230 = vmatprep.subr.bf16.mxu0 0
    %231 = vmatpush1.bf16.msra.mxu0 0
    %232 = vmatprep.subr.bf16.mxu0 0
    %233 = vmatpush1.bf16.msra.mxu0 0
    %234 = vmatprep.subr.bf16.mxu0 0
    %235 = vmatpush1.bf16.msra.mxu0 0
    %236 = vmatprep.subr.bf16.mxu0 0
    %237 = vmatpush1.bf16.msra.mxu0 0
    %238 = vmatprep.subr.bf16.mxu0 %v131
    %239 = vmatpush1.bf16.msra.mxu0 %v130
    %240 = vmatprep.subr.bf16.mxu0 0
    %241 = vmatpush2.bf16.msra.mxu0 0
    %242 = vmatprep.subr.bf16.mxu0 0
    %243 = vmatpush2.bf16.msra.mxu0 0
    %244 = vmatprep.subr.bf16.mxu0 0
    %245 = vmatpush2.bf16.msra.mxu0 0
    %246 = vmatprep.subr.bf16.mxu0 0
    %247 = vmatpush2.bf16.msra.mxu0 0
    %248 = vmatprep.subr.bf16.mxu0 0
    %249 = vmatpush2.bf16.msra.mxu0 0
    %250 = vmatprep.subr.bf16.mxu0 0
    %251 = vmatpush2.bf16.msra.mxu0 0
    %252 = vmatprep.subr.bf16.mxu0 0
    %253 = vmatpush2.bf16.msra.mxu0 0
    %254 = vmatprep.subr.bf16.mxu0 0
    %255 = vmatpush2.bf16.msra.mxu0 0
    %256 = vmatprep.mubr.bf16.mxu0 0
    %257 = vmatmul.mubr.bf16.gmra.mxu0 %v140
    %v258 = vpop.f32.mrf.mxu0
    %v259 = vadd.f32 %v97, %v258
    %v260 = vpop.f32.mrf.mxu0
    %v261 = vadd.f32 %v101, %v260
    %v262 = vpop.f32.mrf.mxu0
    %v263 = vpop.f32.mrf.mxu0
    %264 = vdwg.mxu0
    %v271 = vcombine.low %v177, %v179
    %v272 = vcombine.low %v218, %v220
    %v274 = vunpack.c.l.s4 1983009808
    %v275 = vunpack.c.0.s8 %v274
    %v276 = vlaneseq
    %v277 = vshrl.u32 %v276, 7
    %v278 = vsub.s32 %v275, %v277
    %v279 = vrot.slane %v271, %v278
    %v281 = vunpack.c.l.s4 1983009808
    %v282 = vunpack.c.0.s8 %v281
    %v283 = vlaneseq
    %v284 = vshrl.u32 %v283, 7
    %v285 = vsub.s32 %v282, %v284
    %v286 = vrot.slane %v272, %v285
    %v287 = vcombine.low %v279, %v286
    %v288 = vcombine.low %v259, %v261
    %v290 = vunpack.c.l.s4 1983009808
    %v291 = vunpack.c.0.s8 %v290
    %v292 = vlaneseq
    %v293 = vshrl.u32 %v292, 7
    %v294 = vsub.s32 %v291, %v293
    %v295 = vrot.slane %v288, %v294
    %298 = vst [vmem:[#allocation8] sm:$0xff] %v287
    %299 = vst [vmem:[#allocation8 + $0x8] sm:$0xf] %v295
    // Predicated region
    $region30: #{tpu_custom_call.1} parent=1 // pred_check
      _
    $region31: #{tpu_custom_call.1} parent=1 // pred_check_branch
      %301 = sbr.rel (0) target = $region33
    $region32: #{tpu_custom_call.1} parent=1 // pred_region
      %s303 = ssub.s32 192, 192
      %304 = vsyncadd [#allocation4], %s303
      %s306 = sshll.u32 [#allocation8], 4
      %s307 = int_to_ptr.vmem [resolvable:$true] %s306
      %309 = dma.vmem_to_hbm [thread:$0]  %s307, 192, %s4, [#allocation4]
    $region33: #{tpu_custom_call.1} parent=1 // pred_fallthru
      _
    // Predicated region
    $region34: #{tpu_custom_call.1} parent=1 // pred_check
      _
    $region35: #{tpu_custom_call.1} parent=1 // pred_check_branch
      %311 = sbr.rel (0) target = $region37
    $region36: #{tpu_custom_call.1} parent=1 // pred_region
      %312 = dma.done [#allocation4], 192
    $region37: #{tpu_custom_call.1} parent=1 // pred_fallthru
      _
    %313 = vsyncpa [#allocation3], 1
    %314 = vsyncpa [#allocation6], 1
    %315 = vsyncpa [#allocation4], 1

</llo_original>
